<compile_context>
chip_gen: v7x
topology: tpu7x:2x2x1
jax: 0.10.0
libtpu: 0.0.40
codegen_flags: <defaults>
</compile_context>

<pallas_src>
import functools

import jax
import jax.numpy as jnp
from jax.experimental import pallas as pl
from jax.experimental.pallas import tpu as pltpu

LANE = 128
ROW_ALIGN = 16                         # row-tile multiple (covers bf16 (16,128) tiling)
BN_EPS = 1e-5
MATMUL_DTYPE = jnp.bfloat16            # set to jnp.float32 for bit-faithful f32 math
FUSE_VMEM_BUDGET = 6 * 1024 * 1024     # fuse all layers when the whole slab fits
TILE_VMEM_BUDGET = 12 * 1024 * 1024    # per-step budget for the tiled path
VMEM_LIMIT = 32 * 1024 * 1024          # scoped-VMEM limit safe on v5e/v6e/v7x


def _round_up(x, m):
    return (x + m - 1) // m * m


# ----------------------------------------------------------------------------
# Kernels
# ----------------------------------------------------------------------------
def _fused_mlp_kernel(x_ref, *refs, num_layers, inv_m):
    """All layers fused; whole [M, C] slab resident in VMEM."""
    o_ref = refs[-1]
    param_refs = refs[:-1]
    h = x_ref[...]
    for layer in range(num_layers):
        w_ref, b_ref, g_ref, bt_ref = param_refs[4 * layer:4 * layer + 4]
        # Conv1d(kernel=1) == per-point linear -> MXU matmul (bf16 in, f32 acc).
        z = jnp.dot(h, w_ref[...], preferred_element_type=jnp.float32)
        z = z + b_ref[...]
        # Training-mode BatchNorm1d: per-channel stats over all M = B*N rows.
        mean = jnp.sum(z, axis=0, keepdims=True) * inv_m
        zc = z - mean
        var = jnp.sum(zc * zc, axis=0, keepdims=True) * inv_m   # biased variance
        y = zc * jax.lax.rsqrt(var + BN_EPS) * g_ref[...] + bt_ref[...]
        y = jnp.maximum(y, 0.0)
        if layer + 1 < num_layers:
            h = y.astype(MATMUL_DTYPE)
        else:
            o_ref[...] = y.astype(o_ref.dtype)


def _stats_kernel(x_ref, w_ref, b_ref, z_ref, sum_ref, ssq_ref, *, tm, m_valid):
    """Pass 1: z = x @ w + b; accumulate per-channel sum / sum-of-squares."""
    i = pl.program_id(0)

    z = jnp.dot(x_ref[...], w_ref[...], preferred_element_type=jnp.float32)
    z = z + b_ref[...]
    z_ref[...] = z

    # Rows beyond the true M (M is zero-padded up to a multiple of tm) must
    # not contribute to the batch statistics.
    row = i * tm + jax.lax.broadcasted_iota(jnp.int32, (tm, 1), 0)
    zm = jnp.where(row < m_valid, z, 0.0)

    @pl.when(i == 0)
    def _init():
        sum_ref[...] = jnp.zeros_like(sum_ref)
        ssq_ref[...] = jnp.zeros_like(ssq_ref)

    sum_ref[...] += jnp.sum(zm, axis=0, keepdims=True)
    ssq_ref[...] += jnp.sum(zm * zm, axis=0, keepdims=True)


def _normalize_kernel(z_ref, scale_ref, shift_ref, o_ref):
    """Pass 2: y = relu(z * scale + shift) (BatchNorm affine folded)."""
    y = z_ref[...] * scale_ref[...] + shift_ref[...]
    o_ref[...] = jnp.maximum(y, 0.0).astype(o_ref.dtype)


# ----------------------------------------------------------------------------
# Tiled per-layer driver
# ----------------------------------------------------------------------------
def _pick_tile_m(m, cin_p, cout_p):
    """Largest multiple-of-16 row tile under the per-step VMEM budget."""
    per_row = 4 * cin_p + 16 * cout_p          # double-buffered in/out bytes per row
    tm = max(ROW_ALIGN, min(4096, TILE_VMEM_BUDGET // per_row))
    tm = (tm // ROW_ALIGN) * ROW_ALIGN
    tm = min(tm, _round_up(m, ROW_ALIGN))
    return tm


def _layer_tiled(x2d, w, b, gamma, beta, *, m_valid, tm, out_dtype):
    """One layer on [Mp, Cin_p] -> [Mp, Cout_p] with M tiled & pipelined."""
    mp, cin_p = x2d.shape
    cout_p = w.shape[1]
    grid = (mp // tm,)

    z, s, ss = pl.pallas_call(
        functools.partial(_stats_kernel, tm=tm, m_valid=m_valid),
        grid=grid,
        in_specs=[
            pl.BlockSpec((tm, cin_p), lambda i: (i, 0)),
            pl.BlockSpec((cin_p, cout_p), lambda i: (0, 0)),
            pl.BlockSpec((1, cout_p), lambda i: (0, 0)),
        ],
        out_specs=[
            pl.BlockSpec((tm, cout_p), lambda i: (i, 0)),
            pl.BlockSpec((1, cout_p), lambda i: (0, 0)),   # resident accumulator
            pl.BlockSpec((1, cout_p), lambda i: (0, 0)),   # resident accumulator
        ],
        out_shape=[
            jax.ShapeDtypeStruct((mp, cout_p), jnp.float32),
            jax.ShapeDtypeStruct((1, cout_p), jnp.float32),
            jax.ShapeDtypeStruct((1, cout_p), jnp.float32),
        ],
        compiler_params=pltpu.CompilerParams(
            dimension_semantics=("arbitrary",),     # accumulation across tiles
            vmem_limit_bytes=VMEM_LIMIT,
        ),
    )(x2d, w, b)

    # Tiny [1, Cout_p] math: fold BN into a per-channel scale/shift (f32).
    inv_m = 1.0 / m_valid
    mean = s * inv_m
    var = jnp.maximum(ss * inv_m - mean * mean, 0.0)    # biased variance
    scale = gamma * jax.lax.rsqrt(var + BN_EPS)
    shift = beta - mean * scale

    return pl.pallas_call(
        _normalize_kernel,
        grid=grid,
        in_specs=[
            pl.BlockSpec((tm, cout_p), lambda i: (i, 0)),
            pl.BlockSpec((1, cout_p), lambda i: (0, 0)),
            pl.BlockSpec((1, cout_p), lambda i: (0, 0)),
        ],
        out_specs=pl.BlockSpec((tm, cout_p), lambda i: (i, 0)),
        out_shape=jax.ShapeDtypeStruct((mp, cout_p), out_dtype),
        compiler_params=pltpu.CompilerParams(
            dimension_semantics=("parallel",),      # pure map -> megacore-friendly
            vmem_limit_bytes=VMEM_LIMIT,
        ),
    )(z, scale, shift)


# ----------------------------------------------------------------------------
# Parameters & forward
# ----------------------------------------------------------------------------
def init_mlp_params(key, nch_input, nch_layers):
    """Parameters matching Conv1d(last, outp, 1) + BatchNorm1d(outp) per layer.

    Conv weights are stored pre-transposed as [Cin, Cout]; every channel dim
    is zero-padded to a multiple of 128 (lane-dense). Padded channels carry
    exact zeros through the whole network.
    """
    params = []
    last = nch_input
    for outp in nch_layers:
        key, kw, kb = jax.random.split(key, 3)
        bound = 1.0 / float(last) ** 0.5
        w = jax.random.uniform(kw, (last, outp), jnp.float32, -bound, bound)
        b = jax.random.uniform(kb, (1, outp), jnp.float32, -bound, bound)
        cin_p, cout_p = _round_up(last, LANE), _round_up(outp, LANE)
        w_p = jnp.zeros((cin_p, cout_p), jnp.float32).at[:last, :outp].set(w)
        b_p = jnp.zeros((1, cout_p), jnp.float32).at[:, :outp].set(b)
        g_p = jnp.zeros((1, cout_p), jnp.float32).at[:, :outp].set(1.0)  # BN weight
        bt_p = jnp.zeros((1, cout_p), jnp.float32)                       # BN bias
        params.append((w_p.astype(MATMUL_DTYPE), b_p, g_p, bt_p))
        last = outp
    return params


@functools.partial(jax.jit, static_argnames=("out_channels",))
def mlpnet_forward(x_bcn, params, *, out_channels):
    """[B, Cin, N] float32 -> [B, out_channels, N] float32."""
    B, Cin, N = x_bcn.shape
    m = B * N
    cin_p = params[0][0].shape[0]
    cout_last_p = params[-1][0].shape[1]

    # NCW -> [B*N, C] with channels on the lane axis; pad channels to 128*k.
    x2d = jnp.transpose(x_bcn, (0, 2, 1)).reshape(m, Cin)
    x2d = jnp.pad(x2d, ((0, 0), (0, cin_p - Cin))).astype(MATMUL_DTYPE)

    c_max = max(cin_p, max(p[0].shape[1] for p in params))
    fused_bytes = 14 * m * c_max    # x (bf16) + ~3 live f32 slabs at max width

    if fused_bytes <= FUSE_VMEM_BUDGET:
        # Whole problem fits in VMEM: single launch, no inter-layer HBM traffic.
        flat = [r for p in params for r in p]
        vmem = pl.BlockSpec(memory_space=pltpu.MemorySpace.VMEM)
        y2d = pl.pallas_call(
            functools.partial(_fused_mlp_kernel,
                              num_layers=len(params), inv_m=1.0 / m),
            out_shape=jax.ShapeDtypeStruct((m, cout_last_p), jnp.float32),
            in_specs=[vmem] * (1 + len(flat)),
            out_specs=vmem,
            compiler_params=pltpu.CompilerParams(vmem_limit_bytes=VMEM_LIMIT),
        )(x2d, *flat)
    else:
        # Tiled two-pass path: exact full-batch BN statistics at any M.
        cout_max = max(p[0].shape[1] for p in params)
        tm = _pick_tile_m(m, cin_p, cout_max)
        mp = _round_up(m, tm)
        y2d = jnp.pad(x2d, ((0, mp - m), (0, 0)))
        for li, (w, b, g, bt) in enumerate(params):
            last = li == len(params) - 1
            y2d = _layer_tiled(y2d, w, b, g, bt, m_valid=m, tm=tm,
                               out_dtype=jnp.float32 if last else MATMUL_DTYPE)
        y2d = y2d[:m]

    y2d = y2d[:, :out_channels]
    return jnp.transpose(y2d.reshape(B, N, out_channels), (0, 2, 1))


def _reference_forward(x_bcn, params, out_channels):
    """Pure-JAX reference with matching precision (bf16 matmul, f32 BN)."""
    B, Cin, N = x_bcn.shape
    m = B * N
    cin_p = params[0][0].shape[0]
    h = jnp.transpose(x_bcn, (0, 2, 1)).reshape(m, Cin)
    h = jnp.pad(h, ((0, 0), (0, cin_p - Cin))).astype(MATMUL_DTYPE)
    y = None
    for (w, b, g, bt) in params:
        z = jnp.dot(h, w, preferred_element_type=jnp.float32) + b
        mean = jnp.mean(z, axis=0, keepdims=True)
        var = jnp.mean(jnp.square(z - mean), axis=0, keepdims=True)
        y = jnp.maximum((z - mean) * jax.lax.rsqrt(var + BN_EPS) * g + bt, 0.0)
        h = y.astype(MATMUL_DTYPE)
    y = y[:, :out_channels]
    return jnp.transpose(y.reshape(B, N, out_channels), (0, 2, 1))


if __name__ == "__main__":
    # Small shapes consistent with MLPNet: [B, Cin, N] -> [B, Cout, N].
    B, Cin, N = 2, 4, 16
    nch_layers = [32, 32, 16]

    key = jax.random.PRNGKey(0)
    key, kx = jax.random.split(key)
    x = jax.random.normal(kx, (B, Cin, N), jnp.float32)
    params = init_mlp_params(key, Cin, nch_layers)

    # Small problem -> fused single-kernel path.
    out = jax.block_until_ready(
        mlpnet_forward(x, params, out_channels=nch_layers[-1]))
    assert out.shape == (B, nch_layers[-1], N), out.shape
    assert bool(jnp.all(jnp.isfinite(out)))
    assert bool(jnp.all(out >= 0.0))          # ReLU output
    ref = _reference_forward(x, params, nch_layers[-1])
    assert bool(jnp.allclose(out, ref, rtol=2e-2, atol=2e-2)), \
        float(jnp.max(jnp.abs(out - ref)))

    # Larger N -> tiled two-pass path (exercises pipelined BlockSpecs, the BN
    # accumulators across grid steps, and the padded-row mask: 8000 rows
    # padded up to a multiple of the row tile).
    N2 = 4000
    key, kx2 = jax.random.split(key)
    x2 = jax.random.normal(kx2, (B, Cin, N2), jnp.float32)
    out2 = jax.block_until_ready(
        mlpnet_forward(x2, params, out_channels=nch_layers[-1]))
    assert out2.shape == (B, nch_layers[-1], N2), out2.shape
    ref2 = _reference_forward(x2, params, nch_layers[-1])
    assert bool(jnp.allclose(out2, ref2, rtol=2e-2, atol=2e-2)), \
        float(jnp.max(jnp.abs(out2 - ref2)))

    print("KERNEL_OK")
</pallas_src>

<mosaic_0001>
module attributes {stable_mosaic.version = 11 : i64} {
  func.func @_fused_mlp_kernel(%arg0: memref<32x128xbf16, #tpu.memory_space<vmem>>, %arg1: memref<128x128xbf16, #tpu.memory_space<vmem>>, %arg2: memref<1x128xf32, #tpu.memory_space<vmem>>, %arg3: memref<1x128xf32, #tpu.memory_space<vmem>>, %arg4: memref<1x128xf32, #tpu.memory_space<vmem>>, %arg5: memref<128x128xbf16, #tpu.memory_space<vmem>>, %arg6: memref<1x128xf32, #tpu.memory_space<vmem>>, %arg7: memref<1x128xf32, #tpu.memory_space<vmem>>, %arg8: memref<1x128xf32, #tpu.memory_space<vmem>>, %arg9: memref<128x128xbf16, #tpu.memory_space<vmem>>, %arg10: memref<1x128xf32, #tpu.memory_space<vmem>>, %arg11: memref<1x128xf32, #tpu.memory_space<vmem>>, %arg12: memref<1x128xf32, #tpu.memory_space<vmem>>, %arg13: memref<32x128xf32, #tpu.memory_space<vmem>>) attributes {dimension_semantics = [], scalar_prefetch = 0 : i64, scratch_operands = 0 : i64, tpu.core_type = #tpu.core_type<tc>} {
    %c0 = arith.constant 0 : index
    %c0_0 = arith.constant 0 : index
    %0 = vector.load %arg0[%c0, %c0_0] : memref<32x128xbf16, #tpu.memory_space<vmem>>, vector<32x128xbf16>
    %c0_1 = arith.constant 0 : index
    %c0_2 = arith.constant 0 : index
    %1 = vector.load %arg1[%c0_1, %c0_2] : memref<128x128xbf16, #tpu.memory_space<vmem>>, vector<128x128xbf16>
    %cst = arith.constant dense<0.000000e+00> : vector<32x128xf32>
    %2 = tpu.matmul %0, %1, %cst {dimension_numbers = #tpu.dot_dimension_numbers<[1], [0], [0], [1], [0, 0, 1, 1], [], []>} : vector<32x128xbf16>, vector<128x128xbf16>, vector<32x128xf32> -> vector<32x128xf32>
    %c0_3 = arith.constant 0 : index
    %c0_4 = arith.constant 0 : index
    %3 = vector.load %arg2[%c0_3, %c0_4] : memref<1x128xf32, #tpu.memory_space<vmem>>, vector<1x128xf32>
    %4 = vector.broadcast %3 : vector<1x128xf32> to vector<32x128xf32>
    %5 = arith.addf %2, %4 : vector<32x128xf32>
    %cst_5 = arith.constant dense<0.000000e+00> : vector<128xf32>
    %6 = vector.multi_reduction <add>, %5, %cst_5 [0] : vector<32x128xf32> to vector<128xf32>
    %7 = vector.shape_cast %6 : vector<128xf32> to vector<1x128xf32>
    %cst_6 = arith.constant 3.125000e-02 : f32
    %8 = vector.broadcast %cst_6 : f32 to vector<1x128xf32>
    %9 = arith.mulf %7, %8 : vector<1x128xf32>
    %10 = vector.broadcast %9 : vector<1x128xf32> to vector<32x128xf32>
    %11 = arith.subf %5, %10 : vector<32x128xf32>
    %12 = arith.mulf %11, %11 : vector<32x128xf32>
    %cst_7 = arith.constant dense<0.000000e+00> : vector<128xf32>
    %13 = vector.multi_reduction <add>, %12, %cst_7 [0] : vector<32x128xf32> to vector<128xf32>
    %14 = vector.shape_cast %13 : vector<128xf32> to vector<1x128xf32>
    %cst_8 = arith.constant 3.125000e-02 : f32
    %15 = vector.broadcast %cst_8 : f32 to vector<1x128xf32>
    %16 = arith.mulf %14, %15 : vector<1x128xf32>
    %cst_9 = arith.constant 9.99999974E-6 : f32
    %17 = vector.broadcast %cst_9 : f32 to vector<1x128xf32>
    %18 = arith.addf %16, %17 : vector<1x128xf32>
    %19 = math.rsqrt %18 : vector<1x128xf32>
    %20 = vector.broadcast %19 : vector<1x128xf32> to vector<32x128xf32>
    %21 = arith.mulf %11, %20 : vector<32x128xf32>
    %c0_10 = arith.constant 0 : index
    %c0_11 = arith.constant 0 : index
    %22 = vector.load %arg3[%c0_10, %c0_11] : memref<1x128xf32, #tpu.memory_space<vmem>>, vector<1x128xf32>
    %23 = vector.broadcast %22 : vector<1x128xf32> to vector<32x128xf32>
    %24 = arith.mulf %21, %23 : vector<32x128xf32>
    %c0_12 = arith.constant 0 : index
    %c0_13 = arith.constant 0 : index
    %25 = vector.load %arg4[%c0_12, %c0_13] : memref<1x128xf32, #tpu.memory_space<vmem>>, vector<1x128xf32>
    %26 = vector.broadcast %25 : vector<1x128xf32> to vector<32x128xf32>
    %27 = arith.addf %24, %26 : vector<32x128xf32>
    %cst_14 = arith.constant 0.000000e+00 : f32
    %28 = vector.broadcast %cst_14 : f32 to vector<32x128xf32>
    %29 = arith.maximumf %27, %28 : vector<32x128xf32>
    %30 = arith.truncf %29 : vector<32x128xf32> to vector<32x128xbf16>
    %c0_15 = arith.constant 0 : index
    %c0_16 = arith.constant 0 : index
    %31 = vector.load %arg5[%c0_15, %c0_16] : memref<128x128xbf16, #tpu.memory_space<vmem>>, vector<128x128xbf16>
    %cst_17 = arith.constant dense<0.000000e+00> : vector<32x128xf32>
    %32 = tpu.matmul %30, %31, %cst_17 {dimension_numbers = #tpu.dot_dimension_numbers<[1], [0], [0], [1], [0, 0, 1, 1], [], []>} : vector<32x128xbf16>, vector<128x128xbf16>, vector<32x128xf32> -> vector<32x128xf32>
    %c0_18 = arith.constant 0 : index
    %c0_19 = arith.constant 0 : index
    %33 = vector.load %arg6[%c0_18, %c0_19] : memref<1x128xf32, #tpu.memory_space<vmem>>, vector<1x128xf32>
    %34 = vector.broadcast %33 : vector<1x128xf32> to vector<32x128xf32>
    %35 = arith.addf %32, %34 : vector<32x128xf32>
    %cst_20 = arith.constant dense<0.000000e+00> : vector<128xf32>
    %36 = vector.multi_reduction <add>, %35, %cst_20 [0] : vector<32x128xf32> to vector<128xf32>
    %37 = vector.shape_cast %36 : vector<128xf32> to vector<1x128xf32>
    %cst_21 = arith.constant 3.125000e-02 : f32
    %38 = vector.broadcast %cst_21 : f32 to vector<1x128xf32>
    %39 = arith.mulf %37, %38 : vector<1x128xf32>
    %40 = vector.broadcast %39 : vector<1x128xf32> to vector<32x128xf32>
    %41 = arith.subf %35, %40 : vector<32x128xf32>
    %42 = arith.mulf %41, %41 : vector<32x128xf32>
    %cst_22 = arith.constant dense<0.000000e+00> : vector<128xf32>
    %43 = vector.multi_reduction <add>, %42, %cst_22 [0] : vector<32x128xf32> to vector<128xf32>
    %44 = vector.shape_cast %43 : vector<128xf32> to vector<1x128xf32>
    %cst_23 = arith.constant 3.125000e-02 : f32
    %45 = vector.broadcast %cst_23 : f32 to vector<1x128xf32>
    %46 = arith.mulf %44, %45 : vector<1x128xf32>
    %cst_24 = arith.constant 9.99999974E-6 : f32
    %47 = vector.broadcast %cst_24 : f32 to vector<1x128xf32>
    %48 = arith.addf %46, %47 : vector<1x128xf32>
    %49 = math.rsqrt %48 : vector<1x128xf32>
    %50 = vector.broadcast %49 : vector<1x128xf32> to vector<32x128xf32>
    %51 = arith.mulf %41, %50 : vector<32x128xf32>
    %c0_25 = arith.constant 0 : index
    %c0_26 = arith.constant 0 : index
    %52 = vector.load %arg7[%c0_25, %c0_26] : memref<1x128xf32, #tpu.memory_space<vmem>>, vector<1x128xf32>
    %53 = vector.broadcast %52 : vector<1x128xf32> to vector<32x128xf32>
    %54 = arith.mulf %51, %53 : vector<32x128xf32>
    %c0_27 = arith.constant 0 : index
    %c0_28 = arith.constant 0 : index
    %55 = vector.load %arg8[%c0_27, %c0_28] : memref<1x128xf32, #tpu.memory_space<vmem>>, vector<1x128xf32>
    %56 = vector.broadcast %55 : vector<1x128xf32> to vector<32x128xf32>
    %57 = arith.addf %54, %56 : vector<32x128xf32>
    %cst_29 = arith.constant 0.000000e+00 : f32
    %58 = vector.broadcast %cst_29 : f32 to vector<32x128xf32>
    %59 = arith.maximumf %57, %58 : vector<32x128xf32>
    %60 = arith.truncf %59 : vector<32x128xf32> to vector<32x128xbf16>
    %c0_30 = arith.constant 0 : index
    %c0_31 = arith.constant 0 : index
    %61 = vector.load %arg9[%c0_30, %c0_31] : memref<128x128xbf16, #tpu.memory_space<vmem>>, vector<128x128xbf16>
    %cst_32 = arith.constant dense<0.000000e+00> : vector<32x128xf32>
    %62 = tpu.matmul %60, %61, %cst_32 {dimension_numbers = #tpu.dot_dimension_numbers<[1], [0], [0], [1], [0, 0, 1, 1], [], []>} : vector<32x128xbf16>, vector<128x128xbf16>, vector<32x128xf32> -> vector<32x128xf32>
    %c0_33 = arith.constant 0 : index
    %c0_34 = arith.constant 0 : index
    %63 = vector.load %arg10[%c0_33, %c0_34] : memref<1x128xf32, #tpu.memory_space<vmem>>, vector<1x128xf32>
    %64 = vector.broadcast %63 : vector<1x128xf32> to vector<32x128xf32>
    %65 = arith.addf %62, %64 : vector<32x128xf32>
    %cst_35 = arith.constant dense<0.000000e+00> : vector<128xf32>
    %66 = vector.multi_reduction <add>, %65, %cst_35 [0] : vector<32x128xf32> to vector<128xf32>
    %67 = vector.shape_cast %66 : vector<128xf32> to vector<1x128xf32>
    %cst_36 = arith.constant 3.125000e-02 : f32
    %68 = vector.broadcast %cst_36 : f32 to vector<1x128xf32>
    %69 = arith.mulf %67, %68 : vector<1x128xf32>
    %70 = vector.broadcast %69 : vector<1x128xf32> to vector<32x128xf32>
    %71 = arith.subf %65, %70 : vector<32x128xf32>
    %72 = arith.mulf %71, %71 : vector<32x128xf32>
    %cst_37 = arith.constant dense<0.000000e+00> : vector<128xf32>
    %73 = vector.multi_reduction <add>, %72, %cst_37 [0] : vector<32x128xf32> to vector<128xf32>
    %74 = vector.shape_cast %73 : vector<128xf32> to vector<1x128xf32>
    %cst_38 = arith.constant 3.125000e-02 : f32
    %75 = vector.broadcast %cst_38 : f32 to vector<1x128xf32>
    %76 = arith.mulf %74, %75 : vector<1x128xf32>
    %cst_39 = arith.constant 9.99999974E-6 : f32
    %77 = vector.broadcast %cst_39 : f32 to vector<1x128xf32>
    %78 = arith.addf %76, %77 : vector<1x128xf32>
    %79 = math.rsqrt %78 : vector<1x128xf32>
    %80 = vector.broadcast %79 : vector<1x128xf32> to vector<32x128xf32>
    %81 = arith.mulf %71, %80 : vector<32x128xf32>
    %c0_40 = arith.constant 0 : index
    %c0_41 = arith.constant 0 : index
    %82 = vector.load %arg11[%c0_40, %c0_41] : memref<1x128xf32, #tpu.memory_space<vmem>>, vector<1x128xf32>
    %83 = vector.broadcast %82 : vector<1x128xf32> to vector<32x128xf32>
    %84 = arith.mulf %81, %83 : vector<32x128xf32>
    %c0_42 = arith.constant 0 : index
    %c0_43 = arith.constant 0 : index
    %85 = vector.load %arg12[%c0_42, %c0_43] : memref<1x128xf32, #tpu.memory_space<vmem>>, vector<1x128xf32>
    %86 = vector.broadcast %85 : vector<1x128xf32> to vector<32x128xf32>
    %87 = arith.addf %84, %86 : vector<32x128xf32>
    %cst_44 = arith.constant 0.000000e+00 : f32
    %88 = vector.broadcast %cst_44 : f32 to vector<32x128xf32>
    %89 = arith.maximumf %87, %88 : vector<32x128xf32>
    %c0_45 = arith.constant 0 : index
    %c0_46 = arith.constant 0 : index
    %90 = vector.load %arg13[%c0_45, %c0_46] : memref<32x128xf32, #tpu.memory_space<vmem>>, vector<32x128xf32>
    tpu.vector_store %arg13[%c0_45, %c0_46], %89 {strides = array<i32>} : memref<32x128xf32, #tpu.memory_space<vmem>>, vector<32x128xf32>,
    return
  }
}

</mosaic_0001>

<llo_original>
// kernel: mlpnet_forward.1
$region0: #{mlpnet_forward.1}
  #allocation0 [shape = 'u32[]', space=smem, size = 0x4, offset = 0x4, fixed_abs, tag = 'smem constant byte address 0x4 - core index']
  #allocation1 [shape = 'u32[144,128]{1,0:T(1,128)}', space=vmem, size = 0x12000, scoped, tag = 'internal scratch']
  %s0 = inlined_call_operand.vmem [shape: bf16[32,128], index: 0, kind: input, shape index: {}]
  %s1 = inlined_call_operand.vmem [shape: bf16[128,128], index: 1, kind: input, shape index: {}]
  %s2 = inlined_call_operand.vmem [shape: f32[1,128], index: 2, kind: input, shape index: {}]
  %s3 = inlined_call_operand.vmem [shape: f32[1,128], index: 3, kind: input, shape index: {}]
  %s4 = inlined_call_operand.vmem [shape: f32[1,128], index: 4, kind: input, shape index: {}]
  %s5 = inlined_call_operand.hbm [shape: bf16[128,128], index: 5, kind: input, shape index: {}]
  %s6 = inlined_call_operand.vmem [shape: f32[1,128], index: 6, kind: input, shape index: {}]
  %s7 = inlined_call_operand.vmem [shape: f32[1,128], index: 7, kind: input, shape index: {}]
  %s8 = inlined_call_operand.vmem [shape: f32[1,128], index: 8, kind: input, shape index: {}]
  %s9 = inlined_call_operand.hbm [shape: bf16[128,128], index: 9, kind: input, shape index: {}]
  %s10 = inlined_call_operand.vmem [shape: f32[1,128], index: 10, kind: input, shape index: {}]
  %s11 = inlined_call_operand.vmem [shape: f32[1,128], index: 11, kind: input, shape index: {}]
  %s12 = inlined_call_operand.vmem [shape: f32[1,128], index: 12, kind: input, shape index: {}]
  %s13 = inlined_call_operand.vmem [shape: f32[32,128], index: 13, kind: output, shape index: {}]
  %s14 = sld [smem:[#allocation0]]
  $region70: #{mlpnet_forward.1} parent=0
    _
  %s16 = ssub.s32 1, %s14
  %s17 = scalar_select 0, %s16, %s14
  $region1: #{mlpnet_forward.1} parent=0
    #allocation2 [shape = 'u8[32768]{0}', space=vmem, size = 0x8000, scoped, tag = 'input window, operand 5, single buffered']
    #allocation3 [shape = 's32[1]{0}', space=sflag, size = 0x4, scoped, tag = 'scoped memory for mlpnet_forward.1']
    #allocation4 [shape = 'u8[32768]{0}', space=vmem, size = 0x8000, scoped, tag = 'input window, operand 9, single buffered']
    #allocation5 [shape = 's32[1]{0}', space=sflag, size = 0x4, scoped, tag = 'scoped memory for mlpnet_forward.1']
    %18 = vsyncpa [#allocation3], 0
    %19 = vsyncpa [#allocation5], 0
    // Predicated region
    $region2: #{mlpnet_forward.1} parent=1 // pred_check
      _
    $region3: #{mlpnet_forward.1} parent=1 // pred_check_branch
      %21 = sbr.rel (0) target = $region5
    $region4: #{mlpnet_forward.1} parent=1 // pred_region
      _
    $region5: #{mlpnet_forward.1} parent=1 // pred_fallthru
      _
    // Predicated region
    $region6: #{mlpnet_forward.1} parent=1 // pred_check
      _
    $region7: #{mlpnet_forward.1} parent=1 // pred_check_branch
      %23 = sbr.rel (0) target = $region9
    $region8: #{mlpnet_forward.1} parent=1 // pred_region
      _
    $region9: #{mlpnet_forward.1} parent=1 // pred_fallthru
      _
    // Predicated region
    $region10: #{mlpnet_forward.1} parent=1 // pred_check
      _
    $region11: #{mlpnet_forward.1} parent=1 // pred_check_branch
      %25 = sbr.rel (0) target = $region13
    $region12: #{mlpnet_forward.1} parent=1 // pred_region
      _
    $region13: #{mlpnet_forward.1} parent=1 // pred_fallthru
      _
    // Predicated region
    $region14: #{mlpnet_forward.1} parent=1 // pred_check
      _
    $region15: #{mlpnet_forward.1} parent=1 // pred_check_branch
      %27 = sbr.rel (0) target = $region17
    $region16: #{mlpnet_forward.1} parent=1 // pred_region
      _
    $region17: #{mlpnet_forward.1} parent=1 // pred_fallthru
      _
    // Predicated region
    $region18: #{mlpnet_forward.1} parent=1 // pred_check
      _
    $region19: #{mlpnet_forward.1} parent=1 // pred_check_branch
      %29 = sbr.rel (0) target = $region21
    $region20: #{mlpnet_forward.1} parent=1 // pred_region
      _
    $region21: #{mlpnet_forward.1} parent=1 // pred_fallthru
      _
    // Predicated region
    $region22: #{mlpnet_forward.1} parent=1 // pred_check
      _
    $region23: #{mlpnet_forward.1} parent=1 // pred_check_branch
      %31 = sbr.rel (0) target = $region25
    $region24: #{mlpnet_forward.1} parent=1 // pred_region
      %s33 = ssub.s32 1024, 1024
      %34 = vsyncadd [#allocation3], %s33
      %s35 = sshll.u32 [#allocation2], 4
      %s36 = int_to_ptr.vmem [resolvable:$true] %s35
      %41 = dma.hbm_to_vmem [thread:$0]  %s5, 1024, %s36, [#allocation3], 64, 64, 4
    $region25: #{mlpnet_forward.1} parent=1 // pred_fallthru
      _
    // Predicated region
    $region26: #{mlpnet_forward.1} parent=1 // pred_check
      _
    $region27: #{mlpnet_forward.1} parent=1 // pred_check_branch
      %43 = sbr.rel (0) target = $region29
    $region28: #{mlpnet_forward.1} parent=1 // pred_region
      _
    $region29: #{mlpnet_forward.1} parent=1 // pred_fallthru
      _
    // Predicated region
    $region30: #{mlpnet_forward.1} parent=1 // pred_check
      _
    $region31: #{mlpnet_forward.1} parent=1 // pred_check_branch
      %45 = sbr.rel (0) target = $region33
    $region32: #{mlpnet_forward.1} parent=1 // pred_region
      _
    $region33: #{mlpnet_forward.1} parent=1 // pred_fallthru
      _
    // Predicated region
    $region34: #{mlpnet_forward.1} parent=1 // pred_check
      _
    $region35: #{mlpnet_forward.1} parent=1 // pred_check_branch
      %47 = sbr.rel (0) target = $region37
    $region36: #{mlpnet_forward.1} parent=1 // pred_region
      _
    $region37: #{mlpnet_forward.1} parent=1 // pred_fallthru
      _
    // Predicated region
    $region38: #{mlpnet_forward.1} parent=1 // pred_check
      _
    $region39: #{mlpnet_forward.1} parent=1 // pred_check_branch
      %49 = sbr.rel (0) target = $region41
    $region40: #{mlpnet_forward.1} parent=1 // pred_region
      %s51 = ssub.s32 1024, 1024
      %52 = vsyncadd [#allocation5], %s51
      %s53 = sshll.u32 [#allocation4], 4
      %s54 = int_to_ptr.vmem [resolvable:$true] %s53
      %59 = dma.hbm_to_vmem [thread:$0]  %s9, 1024, %s54, [#allocation5], 64, 64, 4
    $region41: #{mlpnet_forward.1} parent=1 // pred_fallthru
      _
    // Predicated region
    $region42: #{mlpnet_forward.1} parent=1 // pred_check
      _
    $region43: #{mlpnet_forward.1} parent=1 // pred_check_branch
      %61 = sbr.rel (0) target = $region45
    $region44: #{mlpnet_forward.1} parent=1 // pred_region
      _
    $region45: #{mlpnet_forward.1} parent=1 // pred_fallthru
      _
    // Predicated region
    $region46: #{mlpnet_forward.1} parent=1 // pred_check
      _
    $region47: #{mlpnet_forward.1} parent=1 // pred_check_branch
      %63 = sbr.rel (0) target = $region49
    $region48: #{mlpnet_forward.1} parent=1 // pred_region
      _
    $region49: #{mlpnet_forward.1} parent=1 // pred_fallthru
      _
    // Predicated region
    $region50: #{mlpnet_forward.1} parent=1 // pred_check
      _
    $region51: #{mlpnet_forward.1} parent=1 // pred_check_branch
      %65 = sbr.rel (0) target = $region53
    $region52: #{mlpnet_forward.1} parent=1 // pred_region
      _
    $region53: #{mlpnet_forward.1} parent=1 // pred_fallthru
      _
    // Predicated region
    $region54: #{mlpnet_forward.1} parent=1 // pred_check
      _
    $region55: #{mlpnet_forward.1} parent=1 // pred_check_branch
      %67 = sbr.rel (0) target = $region57
    $region56: #{mlpnet_forward.1} parent=1 // pred_region
      %68 = dma.done [#allocation3], 1024
    $region57: #{mlpnet_forward.1} parent=1 // pred_fallthru
      _
    // Predicated region
    $region58: #{mlpnet_forward.1} parent=1 // pred_check
      _
    $region59: #{mlpnet_forward.1} parent=1 // pred_check_branch
      %70 = sbr.rel (0) target = $region61
    $region60: #{mlpnet_forward.1} parent=1 // pred_region
      %71 = dma.done [#allocation5], 1024
    $region61: #{mlpnet_forward.1} parent=1 // pred_fallthru
      _
    %v73 = vld [vmem:[%s0] sm:$0xf]
    %v74 = vld [vmem:[%s0 + $0x4] sm:$0xf]
    %v75 = vld [vmem:[%s0 + $0x8] sm:$0xf]
    %v76 = vld [vmem:[%s0 + $0xc] sm:$0xf]
    %v77 = vld [vmem:[%s1] sm:$0xf]
    %v78 = vld [vmem:[%s1 + $0x4] sm:$0xf]
    %v79 = vld [vmem:[%s1 + $0x8] sm:$0xf]
    %v80 = vld [vmem:[%s1 + $0xc] sm:$0xf]
    %v81 = vld [vmem:[%s1 + $0x10] sm:$0xf]
    %v82 = vld [vmem:[%s1 + $0x14] sm:$0xf]
    %v83 = vld [vmem:[%s1 + $0x18] sm:$0xf]
    %v84 = vld [vmem:[%s1 + $0x1c] sm:$0xf]
    %v85 = vld [vmem:[%s1 + $0x20] sm:$0xf]
    %v86 = vld [vmem:[%s1 + $0x24] sm:$0xf]
    %v87 = vld [vmem:[%s1 + $0x28] sm:$0xf]
    %v88 = vld [vmem:[%s1 + $0x2c] sm:$0xf]
    %v89 = vld [vmem:[%s1 + $0x30] sm:$0xf]
    %v90 = vld [vmem:[%s1 + $0x34] sm:$0xf]
    %v91 = vld [vmem:[%s1 + $0x38] sm:$0xf]
    %v92 = vld [vmem:[%s1 + $0x3c] sm:$0xf]
    %v93 = vld [vmem:[%s2] sm:$0x1]
    %v95 = vlaneseq
    %v96 = vshrl.u32 %v95, 7
    %v97 = vsub.s32 0, %v96
    %v98 = vrot.slane %v93, %v97
    %v104 = vunpack.c.l.b16 %v73
    %v105 = vunpack.c.l.b16 %v74
    %v106 = vunpack.c.l.b16 %v75
    %v107 = vunpack.c.l.b16 %v76
    %v108 = vpack.c.b16 %v105, %v104
    %v109 = vpack.c.b16 %v107, %v106
    %v128 = vunpack.c.l.b16 %v77
    %v129 = vunpack.c.l.b16 %v78
    %v130 = vunpack.c.l.b16 %v79
    %v131 = vunpack.c.l.b16 %v80
    %v132 = vunpack.c.l.b16 %v81
    %v133 = vunpack.c.l.b16 %v82
    %v134 = vunpack.c.l.b16 %v83
    %v135 = vunpack.c.l.b16 %v84
    %v136 = vunpack.c.l.b16 %v85
    %v137 = vunpack.c.l.b16 %v86
    %v138 = vunpack.c.l.b16 %v87
    %v139 = vunpack.c.l.b16 %v88
    %v140 = vunpack.c.l.b16 %v89
    %v141 = vunpack.c.l.b16 %v90
    %v142 = vunpack.c.l.b16 %v91
    %v143 = vunpack.c.l.b16 %v92
    %v144 = vpack.c.b16 %v129, %v128
    %v145 = vpack.c.b16 %v131, %v130
    %v146 = vpack.c.b16 %v133, %v132
    %v147 = vpack.c.b16 %v135, %v134
    %v148 = vpack.c.b16 %v137, %v136
    %v149 = vpack.c.b16 %v139, %v138
    %v150 = vpack.c.b16 %v141, %v140
    %v151 = vpack.c.b16 %v143, %v142
    %160 = vmatprep.subr.bf16.mxu0 0
    %161 = vmatpush1.bf16.msra.mxu0 %v144
    %162 = vmatprep.subr.bf16.mxu0 0
    %163 = vmatpush1.bf16.msra.mxu0 %v145
    %164 = vmatprep.subr.bf16.mxu0 0
    %165 = vmatpush1.bf16.msra.mxu0 %v146
    %166 = vmatprep.subr.bf16.mxu0 0
    %167 = vmatpush1.bf16.msra.mxu0 %v147
    %168 = vmatprep.subr.bf16.mxu0 0
    %169 = vmatpush1.bf16.msra.mxu0 %v148
    %170 = vmatprep.subr.bf16.mxu0 0
    %171 = vmatpush1.bf16.msra.mxu0 %v149
    %172 = vmatprep.subr.bf16.mxu0 0
    %173 = vmatpush1.bf16.msra.mxu0 %v150
    %174 = vmatprep.subr.bf16.mxu0 0
    %175 = vmatpush1.bf16.msra.mxu0 %v151
    %176 = vmatprep.subr.bf16.mxu0 0
    %177 = vmatpush1.bf16.msra.mxu0 0
    %178 = vmatprep.subr.bf16.mxu0 0
    %179 = vmatpush1.bf16.msra.mxu0 0
    %180 = vmatprep.subr.bf16.mxu0 0
    %181 = vmatpush1.bf16.msra.mxu0 0
    %182 = vmatprep.subr.bf16.mxu0 0
    %183 = vmatpush1.bf16.msra.mxu0 0
    %184 = vmatprep.subr.bf16.mxu0 0
    %185 = vmatpush1.bf16.msra.mxu0 0
    %186 = vmatprep.subr.bf16.mxu0 0
    %187 = vmatpush1.bf16.msra.mxu0 0
    %188 = vmatprep.subr.bf16.mxu0 0
    %189 = vmatpush1.bf16.msra.mxu0 0
    %190 = vmatprep.subr.bf16.mxu0 0
    %191 = vmatpush1.bf16.msra.mxu0 0
    %192 = vmatprep.mubr.bf16.mxu0 0
    %193 = vmatmul.mubr.bf16.gmra.mrb[0].mxu0 %v108
    %v194 = vpop.f32.mrb[0].mxu0
    %v195 = vadd.f32 %v98, %v194
    %v196 = vpop.f32.mrb[0].mxu0
    %v197 = vpop.f32.mrb[0].mxu0
    %v198 = vadd.f32 %v98, %v197
    %v199 = vpop.f32.mrb[0].mxu0
    %200 = vmatprep.mubr.bf16.mxu0 0
    %201 = vmatmul.mubr.bf16.gmra.mrb[0].mxu0 %v109
    %v202 = vpop.f32.mrb[0].mxu0
    %v203 = vadd.f32 %v98, %v202
    %v204 = vpop.f32.mrb[0].mxu0
    %v205 = vpop.f32.mrb[0].mxu0
    %v206 = vadd.f32 %v98, %v205
    %v207 = vpop.f32.mrb[0].mxu0
    %208 = vdwg.mxu0
    %v209 = vadd.f32 %v195, %v198
    %v210 = vadd.f32 %v209, %v203
    %v211 = vadd.f32 %v210, %v206
    %v212 = vrot.slane %v211, 4
    %v213 = vadd.f32 %v211, %v212
    %v214 = vrot.slane %v213, 2
    %v215 = vadd.f32 %v213, %v214
    %v216 = vrot.slane %v215, 1
    %v217 = vadd.f32 %v215, %v216
    %v218 = vmul.f32 %v217, 0.03125
    %v219 = vsub.f32 %v195, %v218
    %v220 = vsub.f32 %v198, %v218
    %v221 = vsub.f32 %v203, %v218
    %v222 = vsub.f32 %v206, %v218
    %v223 = vmul.f32 %v219, %v219
    %v224 = vmul.f32 %v220, %v220
    %v225 = vmul.f32 %v221, %v221
    %v226 = vmul.f32 %v222, %v222
    %v227 = vadd.f32 %v223, %v224
    %v228 = vadd.f32 %v227, %v225
    %v229 = vadd.f32 %v228, %v226
    %v230 = vrot.slane %v229, 4
    %v231 = vadd.f32 %v229, %v230
    %v232 = vrot.slane %v231, 2
    %v233 = vadd.f32 %v231, %v232
    %v234 = vrot.slane %v233, 1
    %v235 = vadd.f32 %v233, %v234
    %v236 = vmul.f32 %v235, 0.03125
    %v237 = vadd.f32 %v236, 1e-05
    %v238 = vrsqrt.pop %v237
    %v239 = vmul.f32 %v219, %v238
    %v240 = vmul.f32 %v220, %v238
    %v241 = vmul.f32 %v221, %v238
    %v242 = vmul.f32 %v222, %v238
    %v243 = vld [vmem:[%s3] sm:$0x1]
    %v245 = vlaneseq
    %v246 = vshrl.u32 %v245, 7
    %v247 = vsub.s32 0, %v246
    %v248 = vrot.slane %v243, %v247
    %v250 = vmul.f32 %v239, %v248
    %v251 = vmul.f32 %v240, %v248
    %v252 = vmul.f32 %v241, %v248
    %v253 = vmul.f32 %v242, %v248
    %v254 = vld [vmem:[%s4] sm:$0x1]
    %v256 = vlaneseq
    %v257 = vshrl.u32 %v256, 7
    %v258 = vsub.s32 0, %v257
    %v259 = vrot.slane %v254, %v258
    %v261 = vadd.f32 %v250, %v259
    %v262 = vadd.f32 %v251, %v259
    %v263 = vadd.f32 %v252, %v259
    %v264 = vadd.f32 %v253, %v259
    %v265 = vmax.f32 %v261, 0.0
    %v266 = vmax.f32 %v262, 0.0
    %v267 = vmax.f32 %v263, 0.0
    %v268 = vmax.f32 %v264, 0.0
    %v269 = vpack.c.bf16 %v266, %v265
    %v270 = vpack.c.bf16 %v268, %v267
    %v271 = vld [vmem:[#allocation2] sm:$0xf]
    %v272 = vld [vmem:[#allocation2 + $0x4] sm:$0xf]
    %v273 = vld [vmem:[#allocation2 + $0x8] sm:$0xf]
    %v274 = vld [vmem:[#allocation2 + $0xc] sm:$0xf]
    %v275 = vld [vmem:[#allocation2 + $0x10] sm:$0xf]
    %v276 = vld [vmem:[#allocation2 + $0x14] sm:$0xf]
    %v277 = vld [vmem:[#allocation2 + $0x18] sm:$0xf]
    %v278 = vld [vmem:[#allocation2 + $0x1c] sm:$0xf]
    %v279 = vld [vmem:[#allocation2 + $0x20] sm:$0xf]
    %v280 = vld [vmem:[#allocation2 + $0x24] sm:$0xf]
    %v281 = vld [vmem:[#allocation2 + $0x28] sm:$0xf]
    %v282 = vld [vmem:[#allocation2 + $0x2c] sm:$0xf]
    %v283 = vld [vmem:[#allocation2 + $0x30] sm:$0xf]
    %v284 = vld [vmem:[#allocation2 + $0x34] sm:$0xf]
    %v285 = vld [vmem:[#allocation2 + $0x38] sm:$0xf]
    %v286 = vld [vmem:[#allocation2 + $0x3c] sm:$0xf]
    %v287 = vld [vmem:[%s6] sm:$0x1]
    %v289 = vlaneseq
    %v290 = vshrl.u32 %v289, 7
    %v291 = vsub.s32 0, %v290
    %v292 = vrot.slane %v287, %v291
    %v310 = vunpack.c.l.b16 %v271
    %v311 = vunpack.c.l.b16 %v272
    %v312 = vunpack.c.l.b16 %v273
    %v313 = vunpack.c.l.b16 %v274
    %v314 = vunpack.c.l.b16 %v275
    %v315 = vunpack.c.l.b16 %v276
    %v316 = vunpack.c.l.b16 %v277
    %v317 = vunpack.c.l.b16 %v278
    %v318 = vunpack.c.l.b16 %v279
    %v319 = vunpack.c.l.b16 %v280
    %v320 = vunpack.c.l.b16 %v281
    %v321 = vunpack.c.l.b16 %v282
    %v322 = vunpack.c.l.b16 %v283
    %v323 = vunpack.c.l.b16 %v284
    %v324 = vunpack.c.l.b16 %v285
    %v325 = vunpack.c.l.b16 %v286
    %v326 = vpack.c.b16 %v311, %v310
    %v327 = vpack.c.b16 %v313, %v312
    %v328 = vpack.c.b16 %v315, %v314
    %v329 = vpack.c.b16 %v317, %v316
    %v330 = vpack.c.b16 %v319, %v318
    %v331 = vpack.c.b16 %v321, %v320
    %v332 = vpack.c.b16 %v323, %v322
    %v333 = vpack.c.b16 %v325, %v324
    %342 = vmatprep.subr.bf16.mxu0 0
    %343 = vmatpush1.bf16.msra.mxu0 %v326
    %344 = vmatprep.subr.bf16.mxu0 0
    %345 = vmatpush1.bf16.msra.mxu0 %v327
    %346 = vmatprep.subr.bf16.mxu0 0
    %347 = vmatpush1.bf16.msra.mxu0 %v328
    %348 = vmatprep.subr.bf16.mxu0 0
    %349 = vmatpush1.bf16.msra.mxu0 %v329
    %350 = vmatprep.subr.bf16.mxu0 0
    %351 = vmatpush1.bf16.msra.mxu0 %v330
    %352 = vmatprep.subr.bf16.mxu0 0
    %353 = vmatpush1.bf16.msra.mxu0 %v331
    %354 = vmatprep.subr.bf16.mxu0 0
    %355 = vmatpush1.bf16.msra.mxu0 %v332
    %356 = vmatprep.subr.bf16.mxu0 0
    %357 = vmatpush1.bf16.msra.mxu0 %v333
    %358 = vmatprep.subr.bf16.mxu0 0
    %359 = vmatpush1.bf16.msra.mxu0 0
    %360 = vmatprep.subr.bf16.mxu0 0
    %361 = vmatpush1.bf16.msra.mxu0 0
    %362 = vmatprep.subr.bf16.mxu0 0
    %363 = vmatpush1.bf16.msra.mxu0 0
    %364 = vmatprep.subr.bf16.mxu0 0
    %365 = vmatpush1.bf16.msra.mxu0 0
    %366 = vmatprep.subr.bf16.mxu0 0
    %367 = vmatpush1.bf16.msra.mxu0 0
    %368 = vmatprep.subr.bf16.mxu0 0
    %369 = vmatpush1.bf16.msra.mxu0 0
    %370 = vmatprep.subr.bf16.mxu0 0
    %371 = vmatpush1.bf16.msra.mxu0 0
    %372 = vmatprep.subr.bf16.mxu0 0
    %373 = vmatpush1.bf16.msra.mxu0 0
    %374 = vmatprep.mubr.bf16.mxu0 0
    %375 = vmatmul.mubr.bf16.gmra.mrb[0].mxu0 %v269
    %v376 = vpop.f32.mrb[0].mxu0
    %v377 = vadd.f32 %v292, %v376
    %v378 = vpop.f32.mrb[0].mxu0
    %v379 = vpop.f32.mrb[0].mxu0
    %v380 = vadd.f32 %v292, %v379
    %v381 = vpop.f32.mrb[0].mxu0
    %382 = vmatprep.mubr.bf16.mxu0 0
    %383 = vmatmul.mubr.bf16.gmra.mrb[0].mxu0 %v270
    %v384 = vpop.f32.mrb[0].mxu0
    %v385 = vadd.f32 %v292, %v384
    %v386 = vpop.f32.mrb[0].mxu0
    %v387 = vpop.f32.mrb[0].mxu0
    %v388 = vadd.f32 %v292, %v387
    %v389 = vpop.f32.mrb[0].mxu0
    %390 = vdwg.mxu0
    %v391 = vadd.f32 %v377, %v380
    %v392 = vadd.f32 %v391, %v385
    %v393 = vadd.f32 %v392, %v388
    %v394 = vrot.slane %v393, 4
    %v395 = vadd.f32 %v393, %v394
    %v396 = vrot.slane %v395, 2
    %v397 = vadd.f32 %v395, %v396
    %v398 = vrot.slane %v397, 1
    %v399 = vadd.f32 %v397, %v398
    %v400 = vmul.f32 %v399, 0.03125
    %v401 = vsub.f32 %v377, %v400
    %v402 = vsub.f32 %v380, %v400
    %v403 = vsub.f32 %v385, %v400
    %v404 = vsub.f32 %v388, %v400
    %v405 = vmul.f32 %v401, %v401
    %v406 = vmul.f32 %v402, %v402
    %v407 = vmul.f32 %v403, %v403
    %v408 = vmul.f32 %v404, %v404
    %v409 = vadd.f32 %v405, %v406
    %v410 = vadd.f32 %v409, %v407
    %v411 = vadd.f32 %v410, %v408
    %v412 = vrot.slane %v411, 4
    %v413 = vadd.f32 %v411, %v412
    %v414 = vrot.slane %v413, 2
    %v415 = vadd.f32 %v413, %v414
    %v416 = vrot.slane %v415, 1
    %v417 = vadd.f32 %v415, %v416
    %v418 = vmul.f32 %v417, 0.03125
    %v419 = vadd.f32 %v418, 1e-05
    %v420 = vrsqrt.pop %v419
    %v421 = vmul.f32 %v401, %v420
    %v422 = vmul.f32 %v402, %v420
    %v423 = vmul.f32 %v403, %v420
    %v424 = vmul.f32 %v404, %v420
    %v425 = vld [vmem:[%s7] sm:$0x1]
    %v427 = vlaneseq
    %v428 = vshrl.u32 %v427, 7
    %v429 = vsub.s32 0, %v428
    %v430 = vrot.slane %v425, %v429
    %v432 = vmul.f32 %v421, %v430
    %v433 = vmul.f32 %v422, %v430
    %v434 = vmul.f32 %v423, %v430
    %v435 = vmul.f32 %v424, %v430
    %v436 = vld [vmem:[%s8] sm:$0x1]
    %v438 = vlaneseq
    %v439 = vshrl.u32 %v438, 7
    %v440 = vsub.s32 0, %v439
    %v441 = vrot.slane %v436, %v440
    %v443 = vadd.f32 %v432, %v441
    %v444 = vadd.f32 %v433, %v441
    %v445 = vadd.f32 %v434, %v441
    %v446 = vadd.f32 %v435, %v441
    %v447 = vmax.f32 %v443, 0.0
    %v448 = vmax.f32 %v444, 0.0
    %v449 = vmax.f32 %v445, 0.0
    %v450 = vmax.f32 %v446, 0.0
    %v451 = vpack.c.bf16 %v448, %v447
    %v452 = vpack.c.bf16 %v450, %v449
    %v453 = vld [vmem:[#allocation4] sm:$0xf]
    %v454 = vld [vmem:[#allocation4 + $0x4] sm:$0xf]
    %v455 = vld [vmem:[#allocation4 + $0x8] sm:$0xf]
    %v456 = vld [vmem:[#allocation4 + $0xc] sm:$0xf]
    %v457 = vld [vmem:[#allocation4 + $0x10] sm:$0xf]
    %v458 = vld [vmem:[#allocation4 + $0x14] sm:$0xf]
    %v459 = vld [vmem:[#allocation4 + $0x18] sm:$0xf]
    %v460 = vld [vmem:[#allocation4 + $0x1c] sm:$0xf]
    %v461 = vld [vmem:[#allocation4 + $0x20] sm:$0xf]
    %v462 = vld [vmem:[#allocation4 + $0x24] sm:$0xf]
    %v463 = vld [vmem:[#allocation4 + $0x28] sm:$0xf]
    %v464 = vld [vmem:[#allocation4 + $0x2c] sm:$0xf]
    %v465 = vld [vmem:[#allocation4 + $0x30] sm:$0xf]
    %v466 = vld [vmem:[#allocation4 + $0x34] sm:$0xf]
    %v467 = vld [vmem:[#allocation4 + $0x38] sm:$0xf]
    %v468 = vld [vmem:[#allocation4 + $0x3c] sm:$0xf]
    %v469 = vld [vmem:[%s10] sm:$0x1]
    %v471 = vlaneseq
    %v472 = vshrl.u32 %v471, 7
    %v473 = vsub.s32 0, %v472
    %v474 = vrot.slane %v469, %v473
    %v492 = vunpack.c.l.b16 %v453
    %v493 = vunpack.c.l.b16 %v454
    %v494 = vunpack.c.l.b16 %v455
    %v495 = vunpack.c.l.b16 %v456
    %v496 = vunpack.c.l.b16 %v457
    %v497 = vunpack.c.l.b16 %v458
    %v498 = vunpack.c.l.b16 %v459
    %v499 = vunpack.c.l.b16 %v460
    %v500 = vunpack.c.l.b16 %v461
    %v501 = vunpack.c.l.b16 %v462
    %v502 = vunpack.c.l.b16 %v463
    %v503 = vunpack.c.l.b16 %v464
    %v504 = vunpack.c.l.b16 %v465
    %v505 = vunpack.c.l.b16 %v466
    %v506 = vunpack.c.l.b16 %v467
    %v507 = vunpack.c.l.b16 %v468
    %v508 = vpack.c.b16 %v493, %v492
    %v509 = vpack.c.b16 %v495, %v494
    %v510 = vpack.c.b16 %v497, %v496
    %v511 = vpack.c.b16 %v499, %v498
    %v512 = vpack.c.b16 %v501, %v500
    %v513 = vpack.c.b16 %v503, %v502
    %v514 = vpack.c.b16 %v505, %v504
    %v515 = vpack.c.b16 %v507, %v506
    %524 = vmatprep.subr.bf16.mxu0 0
    %525 = vmatpush1.bf16.msra.mxu0 %v508
    %526 = vmatprep.subr.bf16.mxu0 0
    %527 = vmatpush1.bf16.msra.mxu0 %v509
    %528 = vmatprep.subr.bf16.mxu0 0
    %529 = vmatpush1.bf16.msra.mxu0 %v510
    %530 = vmatprep.subr.bf16.mxu0 0
    %531 = vmatpush1.bf16.msra.mxu0 %v511
    %532 = vmatprep.subr.bf16.mxu0 0
    %533 = vmatpush1.bf16.msra.mxu0 %v512
    %534 = vmatprep.subr.bf16.mxu0 0
    %535 = vmatpush1.bf16.msra.mxu0 %v513
    %536 = vmatprep.subr.bf16.mxu0 0
    %537 = vmatpush1.bf16.msra.mxu0 %v514
    %538 = vmatprep.subr.bf16.mxu0 0
    %539 = vmatpush1.bf16.msra.mxu0 %v515
    %540 = vmatprep.subr.bf16.mxu0 0
    %541 = vmatpush1.bf16.msra.mxu0 0
    %542 = vmatprep.subr.bf16.mxu0 0
    %543 = vmatpush1.bf16.msra.mxu0 0
    %544 = vmatprep.subr.bf16.mxu0 0
    %545 = vmatpush1.bf16.msra.mxu0 0
    %546 = vmatprep.subr.bf16.mxu0 0
    %547 = vmatpush1.bf16.msra.mxu0 0
    %548 = vmatprep.subr.bf16.mxu0 0
    %549 = vmatpush1.bf16.msra.mxu0 0
    %550 = vmatprep.subr.bf16.mxu0 0
    %551 = vmatpush1.bf16.msra.mxu0 0
    %552 = vmatprep.subr.bf16.mxu0 0
    %553 = vmatpush1.bf16.msra.mxu0 0
    %554 = vmatprep.subr.bf16.mxu0 0
    %555 = vmatpush1.bf16.msra.mxu0 0
    %556 = vmatprep.mubr.bf16.mxu0 0
    %557 = vmatmul.mubr.bf16.gmra.mrb[0].mxu0 %v451
    %v558 = vpop.f32.mrb[0].mxu0
    %v559 = vadd.f32 %v474, %v558
    %v560 = vpop.f32.mrb[0].mxu0
    %v561 = vpop.f32.mrb[0].mxu0
    %v562 = vadd.f32 %v474, %v561
    %v563 = vpop.f32.mrb[0].mxu0
    %564 = vmatprep.mubr.bf16.mxu0 0
    %565 = vmatmul.mubr.bf16.gmra.mrb[0].mxu0 %v452
    %v566 = vpop.f32.mrb[0].mxu0
    %v567 = vadd.f32 %v474, %v566
    %v568 = vpop.f32.mrb[0].mxu0
    %v569 = vpop.f32.mrb[0].mxu0
    %v570 = vadd.f32 %v474, %v569
    %v571 = vpop.f32.mrb[0].mxu0
    %572 = vdwg.mxu0
    %v573 = vadd.f32 %v559, %v562
    %v574 = vadd.f32 %v573, %v567
    %v575 = vadd.f32 %v574, %v570
    %v576 = vrot.slane %v575, 4
    %v577 = vadd.f32 %v575, %v576
    %v578 = vrot.slane %v577, 2
    %v579 = vadd.f32 %v577, %v578
    %v580 = vrot.slane %v579, 1
    %v581 = vadd.f32 %v579, %v580
    %v582 = vmul.f32 %v581, 0.03125
    %v583 = vsub.f32 %v559, %v582
    %v584 = vsub.f32 %v562, %v582
    %v585 = vsub.f32 %v567, %v582
    %v586 = vsub.f32 %v570, %v582
    %v587 = vmul.f32 %v583, %v583
    %v588 = vmul.f32 %v584, %v584
    %v589 = vmul.f32 %v585, %v585
    %v590 = vmul.f32 %v586, %v586
    %v591 = vadd.f32 %v587, %v588
    %v592 = vadd.f32 %v591, %v589
    %v593 = vadd.f32 %v592, %v590
    %v594 = vrot.slane %v593, 4
    %v595 = vadd.f32 %v593, %v594
    %v596 = vrot.slane %v595, 2
    %v597 = vadd.f32 %v595, %v596
    %v598 = vrot.slane %v597, 1
    %v599 = vadd.f32 %v597, %v598
    %v600 = vmul.f32 %v599, 0.03125
    %v601 = vadd.f32 %v600, 1e-05
    %v602 = vrsqrt.pop %v601
    %v603 = vmul.f32 %v583, %v602
    %v604 = vmul.f32 %v584, %v602
    %v605 = vmul.f32 %v585, %v602
    %v606 = vmul.f32 %v586, %v602
    %v607 = vld [vmem:[%s11] sm:$0x1]
    %v609 = vlaneseq
    %v610 = vshrl.u32 %v609, 7
    %v611 = vsub.s32 0, %v610
    %v612 = vrot.slane %v607, %v611
    %v614 = vmul.f32 %v603, %v612
    %v615 = vmul.f32 %v604, %v612
    %v616 = vmul.f32 %v605, %v612
    %v617 = vmul.f32 %v606, %v612
    %v618 = vld [vmem:[%s12] sm:$0x1]
    %v620 = vlaneseq
    %v621 = vshrl.u32 %v620, 7
    %v622 = vsub.s32 0, %v621
    %v623 = vrot.slane %v618, %v622
    %v625 = vadd.f32 %v614, %v623
    %v626 = vadd.f32 %v615, %v623
    %v627 = vadd.f32 %v616, %v623
    %v628 = vadd.f32 %v617, %v623
    %v629 = vmax.f32 %v625, 0.0
    %v630 = vmax.f32 %v626, 0.0
    %v631 = vmax.f32 %v627, 0.0
    %v632 = vmax.f32 %v628, 0.0
    %633 = vst [vmem:[%s13] sm:$0xff] %v629
    %634 = vst [vmem:[%s13 + $0x8] sm:$0xff] %v630
    %635 = vst [vmem:[%s13 + $0x10] sm:$0xff] %v631
    %636 = vst [vmem:[%s13 + $0x18] sm:$0xff] %v632
    // Predicated region
    $region62: #{mlpnet_forward.1} parent=1 // pred_check
      _
    $region63: #{mlpnet_forward.1} parent=1 // pred_check_branch
      %638 = sbr.rel (0) target = $region65
    $region64: #{mlpnet_forward.1} parent=1 // pred_region
      _
    $region65: #{mlpnet_forward.1} parent=1 // pred_fallthru
      _
    // Predicated region
    $region66: #{mlpnet_forward.1} parent=1 // pred_check
      _
    $region67: #{mlpnet_forward.1} parent=1 // pred_check_branch
      %640 = sbr.rel (0) target = $region69
    $region68: #{mlpnet_forward.1} parent=1 // pred_region
      _
    $region69: #{mlpnet_forward.1} parent=1 // pred_fallthru
      _
    %641 = vsyncpa [#allocation3], 1
    %642 = vsyncpa [#allocation5], 1

</llo_original>
